<compile_context>
chip_gen: v7x
topology: tpu7x:2x2x1
jax: 0.10.0
libtpu: 0.0.40
codegen_flags: <defaults>
</compile_context>

<pallas_src>
import jax
import jax.numpy as jnp
from jax.experimental import pallas as pl
from jax.experimental.pallas import tpu as pltpu


# ---------------------------------------------------------------------------
# Pallas kernel: per-row affine  out = x * scale + shift
# ---------------------------------------------------------------------------
def _frozen_bn_kernel(x_ref, scale_ref, shift_ref, o_ref):
    # x block: (tm, tl); scale/shift blocks: (tm, 1), broadcast over lanes.
    x = x_ref[...].astype(jnp.float32)
    o_ref[...] = (x * scale_ref[...] + shift_ref[...]).astype(o_ref.dtype)


def frozen_batch_norm_2d(x, weight, bias, running_mean, running_var, eps=1e-5):
    """FrozenBatchNorm2d.forward for an NCHW tensor.

    x: (N, C, H, W); weight/bias/running_mean/running_var: (C,).
    Returns an array of the same shape and dtype as x.
    """
    N, C, H, W = x.shape
    out_dtype = x.dtype

    # Fold frozen statistics + affine params into per-channel scale/shift (f32).
    scale_c = weight.astype(jnp.float32) * jax.lax.rsqrt(
        running_var.astype(jnp.float32) + jnp.float32(eps))
    shift_c = bias.astype(jnp.float32) - running_mean.astype(jnp.float32) * scale_c

    # View NCHW as (N*C, H*W): zero-copy reshape, channels on sublanes,
    # spatial axis lane-dense.  Per-row scale/shift are tiny (N*C elements).
    M, L = N * C, H * W
    x2 = x.reshape(M, L)
    scale_rows = jnp.tile(scale_c, N).reshape(M, 1)
    shift_rows = jnp.tile(shift_c, N).reshape(M, 1)

    # Tile sizes: large lane-dense blocks for pipelined HBM streaming; fall
    # back to the full extent when a dim is smaller than one aligned tile
    # (full-extent blocks are exempt from the (8,128) divisibility rule).
    tm = 256 if M >= 256 else M
    tl = 2048 if L >= 2048 else (512 if L >= 512 else L)
    grid = (pl.cdiv(M, tm), pl.cdiv(L, tl))

    out = pl.pallas_call(
        _frozen_bn_kernel,
        out_shape=jax.ShapeDtypeStruct((M, L), out_dtype),
        grid=grid,
        in_specs=[
            pl.BlockSpec((tm, tl), lambda i, j: (i, j)),
            pl.BlockSpec((tm, 1), lambda i, j: (i, 0)),
            pl.BlockSpec((tm, 1), lambda i, j: (i, 0)),
        ],
        out_specs=pl.BlockSpec((tm, tl), lambda i, j: (i, j)),
        compiler_params=pltpu.CompilerParams(
            dimension_semantics=("parallel", "parallel")),
    )(x2, scale_rows, shift_rows)

    return out.reshape(N, C, H, W)


# ---------------------------------------------------------------------------
# Pure-JAX reference (mirrors F.batch_norm(..., training=False))
# ---------------------------------------------------------------------------
def _frozen_bn_ref(x, weight, bias, running_mean, running_var, eps=1e-5):
    scale = weight * jax.lax.rsqrt(running_var + eps)
    shift = bias - running_mean * scale
    return x * scale[None, :, None, None] + shift[None, :, None, None]


if __name__ == "__main__":
    key = jax.random.PRNGKey(0)

    def run_case(key, n, c, h, w):
        kx, kw, kb, km, kv = jax.random.split(key, 5)
        x = jax.random.normal(kx, (n, c, h, w), jnp.float32)
        weight = 1.0 + 0.1 * jax.random.normal(kw, (c,), jnp.float32)
        bias = 0.1 * jax.random.normal(kb, (c,), jnp.float32)
        running_mean = 0.1 * jax.random.normal(km, (c,), jnp.float32)
        running_var = 1.0 + 0.1 * jax.random.uniform(kv, (c,), jnp.float32)

        out = frozen_batch_norm_2d(x, weight, bias, running_mean, running_var)
        out = jax.block_until_ready(out)
        ref = _frozen_bn_ref(x, weight, bias, running_mean, running_var)

        assert out.shape == x.shape and out.dtype == x.dtype
        assert bool(jnp.all(jnp.isfinite(out)))
        assert bool(jnp.allclose(out, ref, rtol=1e-5, atol=1e-5))

    k1, k2 = jax.random.split(key)
    # Small case matching the module's typical usage (batch=2, channels=4, 16x16).
    run_case(k1, 2, 4, 16, 16)
    # Larger case exercising the multi-block (tiled, pipelined) path.
    run_case(k2, 2, 128, 32, 32)

    print("KERNEL_OK")
</pallas_src>

<mosaic_0001>
module attributes {stable_mosaic.version = 11 : i64} {
  func.func @_frozen_bn_kernel(%arg0: i32, %arg1: i32, %arg2: memref<8x256xf32, #tpu.memory_space<vmem>>, %arg3: memref<8x1xf32, #tpu.memory_space<vmem>>, %arg4: memref<8x1xf32, #tpu.memory_space<vmem>>, %arg5: memref<8x256xf32, #tpu.memory_space<vmem>>) attributes {dimension_semantics = [#tpu.dimension_semantics<parallel>, #tpu.dimension_semantics<parallel>], iteration_bounds = array<i64: 1, 1>, scalar_prefetch = 0 : i64, scratch_operands = 0 : i64, tpu.core_type = #tpu.core_type<tc>, window_params = [{transform_indices = @transform_0, window_bounds = array<i64: 8, 256>}, {transform_indices = @transform_1, window_bounds = array<i64: 8, 1>}, {transform_indices = @transform_2, window_bounds = array<i64: 8, 1>}, {transform_indices = @transform_3, window_bounds = array<i64: 8, 256>}]} {
    %c0 = arith.constant 0 : index
    %c0_0 = arith.constant 0 : index
    %0 = vector.load %arg2[%c0, %c0_0] : memref<8x256xf32, #tpu.memory_space<vmem>>, vector<8x256xf32>
    %c0_1 = arith.constant 0 : index
    %c0_2 = arith.constant 0 : index
    %1 = vector.load %arg3[%c0_1, %c0_2] : memref<8x1xf32, #tpu.memory_space<vmem>>, vector<8x1xf32>
    %2 = vector.broadcast %1 : vector<8x1xf32> to vector<8x256xf32>
    %3 = arith.mulf %0, %2 : vector<8x256xf32>
    %c0_3 = arith.constant 0 : index
    %c0_4 = arith.constant 0 : index
    %4 = vector.load %arg4[%c0_3, %c0_4] : memref<8x1xf32, #tpu.memory_space<vmem>>, vector<8x1xf32>
    %5 = vector.broadcast %4 : vector<8x1xf32> to vector<8x256xf32>
    %6 = arith.addf %3, %5 : vector<8x256xf32>
    %c0_5 = arith.constant 0 : index
    %c0_6 = arith.constant 0 : index
    %7 = vector.load %arg5[%c0_5, %c0_6] : memref<8x256xf32, #tpu.memory_space<vmem>>, vector<8x256xf32>
    tpu.vector_store %arg5[%c0_5, %c0_6], %6 {strides = array<i32>} : memref<8x256xf32, #tpu.memory_space<vmem>>, vector<8x256xf32>,
    return
  }
  func.func @transform_0(%arg0: i32, %arg1: i32) -> (i32, i32) {
    %c0_i32 = arith.constant 0 : i32
    return %arg0, %arg1 : i32, i32
  }
  func.func @transform_1(%arg0: i32, %arg1: i32) -> (i32, i32) {
    %c0_i32 = arith.constant 0 : i32
    %c0_i32_0 = arith.constant 0 : i32
    return %arg0, %c0_i32 : i32, i32
  }
  func.func @transform_2(%arg0: i32, %arg1: i32) -> (i32, i32) {
    %c0_i32 = arith.constant 0 : i32
    %c0_i32_0 = arith.constant 0 : i32
    return %arg0, %c0_i32 : i32, i32
  }
  func.func @transform_3(%arg0: i32, %arg1: i32) -> (i32, i32) {
    %c0_i32 = arith.constant 0 : i32
    return %arg0, %arg1 : i32, i32
  }
}

</mosaic_0001>

<llo_original>
// kernel: tpu_custom_call.1
$region0: #{tpu_custom_call.1}
  #allocation0 [shape = 'u32[]', space=smem, size = 0x4, offset = 0x4, fixed_abs, tag = 'smem constant byte address 0x4 - core index']
  #allocation1 [shape = 'u32[144,128]{1,0:T(1,128)}', space=vmem, size = 0x12000, scoped, tag = 'internal scratch']
  %s0 = inlined_call_operand.vmem [shape: f32[8,256], index: 0, kind: input, shape index: {}]
  %s1 = inlined_call_operand.vmem [shape: f32[8,1], index: 1, kind: input, shape index: {}]
  %s2 = inlined_call_operand.vmem [shape: f32[8,1], index: 2, kind: input, shape index: {}]
  %s3 = inlined_call_operand.hbm [shape: f32[8,256], index: 3, kind: output, shape index: {}]
  %s4 = sld [smem:[#allocation0]]
  $region22: #{tpu_custom_call.1} parent=0
    _
  %s6 = ssub.s32 1, %s4
  %s7 = scalar_select 0, %s6, %s4
  $region1: #{tpu_custom_call.1} parent=0
    #allocation2 [shape = 'u8[8192]{0}', space=vmem, size = 0x2000, scoped, tag = 'output window, operand 0, single buffered']
    #allocation3 [shape = 's32[1]{0}', space=sflag, size = 0x4, scoped, tag = 'scoped memory for tpu_custom_call.1']
    %8 = vsyncpa [#allocation3], 0
    // Predicated region
    $region2: #{tpu_custom_call.1} parent=1 // pred_check
      _
    $region3: #{tpu_custom_call.1} parent=1 // pred_check_branch
      %10 = sbr.rel (0) target = $region5
    $region4: #{tpu_custom_call.1} parent=1 // pred_region
      _
    $region5: #{tpu_custom_call.1} parent=1 // pred_fallthru
      _
    // Predicated region
    $region6: #{tpu_custom_call.1} parent=1 // pred_check
      _
    $region7: #{tpu_custom_call.1} parent=1 // pred_check_branch
      %12 = sbr.rel (0) target = $region9
    $region8: #{tpu_custom_call.1} parent=1 // pred_region
      _
    $region9: #{tpu_custom_call.1} parent=1 // pred_fallthru
      _
    // Predicated region
    $region10: #{tpu_custom_call.1} parent=1 // pred_check
      _
    $region11: #{tpu_custom_call.1} parent=1 // pred_check_branch
      %14 = sbr.rel (0) target = $region13
    $region12: #{tpu_custom_call.1} parent=1 // pred_region
      _
    $region13: #{tpu_custom_call.1} parent=1 // pred_fallthru
      _
    %v15 = vld [vmem:[%s0] sm:$0xff]
    %v16 = vld [vmem:[%s0 + $0x8] sm:$0xff]
    %v17 = vld [vmem:[%s1] sm:$0xff]
    %19 = vset.pattern.permute.xlu0 0
    %20 = vperm.xlu0 %19, %v17
    %v21 = vpop.permute.xlu0 %20
    %v23 = vmul.f32 %v15, %v21
    %v24 = vmul.f32 %v16, %v21
    %v25 = vld [vmem:[%s2] sm:$0xff]
    %27 = vset.pattern.permute.xlu0 0
    %28 = vperm.xlu0 %27, %v25
    %v29 = vpop.permute.xlu0 %28
    %v31 = vadd.f32 %v23, %v29
    %v32 = vadd.f32 %v24, %v29
    %33 = vst [vmem:[#allocation2] sm:$0xff] %v31
    %34 = vst [vmem:[#allocation2 + $0x8] sm:$0xff] %v32
    // Predicated region
    $region14: #{tpu_custom_call.1} parent=1 // pred_check
      _
    $region15: #{tpu_custom_call.1} parent=1 // pred_check_branch
      %36 = sbr.rel (0) target = $region17
    $region16: #{tpu_custom_call.1} parent=1 // pred_region
      %s38 = ssub.s32 256, 256
      %39 = vsyncadd [#allocation3], %s38
      %s41 = sshll.u32 [#allocation2], 4
      %s42 = int_to_ptr.vmem [resolvable:$true] %s41
      %44 = dma.vmem_to_hbm [thread:$0]  %s42, 256, %s3, [#allocation3]
    $region17: #{tpu_custom_call.1} parent=1 // pred_fallthru
      _
    // Predicated region
    $region18: #{tpu_custom_call.1} parent=1 // pred_check
      _
    $region19: #{tpu_custom_call.1} parent=1 // pred_check_branch
      %46 = sbr.rel (0) target = $region21
    $region20: #{tpu_custom_call.1} parent=1 // pred_region
      %47 = dma.done [#allocation3], 256
    $region21: #{tpu_custom_call.1} parent=1 // pred_fallthru
      _
    %48 = vsyncpa [#allocation3], 1

</llo_original>
